<compile_context>
chip_gen: v5e
topology: v5e:2x2
jax: 0.10.0
libtpu: 0.0.40
codegen_flags: <defaults>
</compile_context>

<pallas_src>
import jax
import jax.numpy as jnp
from jax.experimental import pallas as pl
from jax.experimental.pallas import tpu as pltpu


# ----------------------------------------------------------------------------
# Helpers
# ----------------------------------------------------------------------------
def _round_up(n, m=128):
    return ((n + m - 1) // m) * m


def _pad_to(a, shape):
    """Zero-pad a 2-D array up to `shape` (rows, cols)."""
    return jnp.pad(a, [(0, s - d) for s, d in zip(shape, a.shape)])


def _batch_tiling(B):
    """Pick the batch tile bm (rows), grid length, and padded batch size.

    bm is always a multiple of 16 (sublane-aligned for f32 and bf16 packing).
    The batch is padded up to a multiple of bm in the wrapper, so ragged
    batches never degenerate into tiny tiles / long grids.
    """
    if B >= 512:
        bm = 256                                  # big batches: large tiles
    elif B >= 16:
        bm = _round_up(pl.cdiv(B, 2), 16)         # >=2 blocks -> v7x megacore
    else:
        bm = _round_up(max(B, 1), 16)             # tiny batch: one block
    B_pad = _round_up(B, bm)
    return bm, B_pad // bm, B_pad


def _vmem_limit_bytes(inputs, flat_params, bm, out_pad):
    """Scoped-VMEM budget derived from the actual buffers, with headroom."""
    # Parameters are single-buffered (pl.Buffered(1), constant index map).
    param_bytes = sum(int(p.size) * p.dtype.itemsize for p in flat_params)
    # Input / output tiles are double-buffered by the default pipeline.
    in_bytes = sum(2 * bm * a.shape[1] * a.dtype.itemsize for a in inputs)
    out_bytes = 2 * bm * out_pad * 4
    # Live f32 activations (a few tiles at the widest layer) + MXU staging.
    max_feat = max(p.shape[1] for p in flat_params)
    act_bytes = 4 * bm * max_feat * 4
    need = param_bytes + in_bytes + out_bytes + act_bytes
    limit = int(need * 1.5) + (8 << 20)
    return int(min(max(limit, 32 << 20), 100 << 20))


# ----------------------------------------------------------------------------
# Fused Pallas kernel: all Linear(+ReLU) layers in one invocation
# ----------------------------------------------------------------------------
def _make_fused_mlp_kernel(n_inputs: int, n_layers: int, compute_dtype):
    """refs = (*input_refs, *param_refs, o_ref).

    param_refs layout: [W0_piece_0, (W0_piece_1,) b0, W1, b1, ..., W_last, b_last]
    The first layer has one weight piece per input ref (row-split of the
    concatenated weight matrix), so no concatenate is ever materialized.
    Accumulation is always f32; `compute_dtype` controls the MXU input dtype.
    """
    def kernel(*refs):
        in_refs = refs[:n_inputs]
        o_ref = refs[-1]
        p = refs[n_inputs:-1]

        # Layer 0: partial dots over the input pieces, accumulated in f32.
        # TODO(synk): for nx+ny <= 128 the two pieces could be packed into one
        # VMEM tile and issued as a single MXU pass; kept split for simplicity.
        pi = 0
        acc = None
        for r in in_refs:
            part = jnp.dot(r[...].astype(compute_dtype), p[pi][...],
                           preferred_element_type=jnp.float32)
            pi += 1
            acc = part if acc is None else acc + part
        acc = acc + p[pi][...].astype(jnp.float32)   # bias (1, h_pad) broadcast
        pi += 1
        if n_layers > 1:
            acc = jnp.maximum(acc, 0.0)

        # Remaining layers; activations stay as f32 values in VMEM/vregs.
        for layer in range(1, n_layers):
            acc = (jnp.dot(acc.astype(compute_dtype), p[pi][...],
                           preferred_element_type=jnp.float32)
                   + p[pi + 1][...].astype(jnp.float32))
            pi += 2
            if layer != n_layers - 1:
                acc = jnp.maximum(acc, 0.0)

        o_ref[...] = acc.astype(o_ref.dtype)

    return kernel


def fused_mlp_pallas(inputs, flat_params, out_pad, n_layers, compute_dtype):
    """Run the fused MLP. `inputs` is a tuple of (B, feat_i) arrays.

    Returns the padded output (B_pad, out_pad) plus B_pad so the caller can
    slice (slicing is skipped when no padding was added).
    """
    B = inputs[0].shape[0]
    bm, grid_m, B_pad = _batch_tiling(B)
    if B_pad != B:
        inputs = tuple(jnp.pad(a, ((0, B_pad - B), (0, 0))) for a in inputs)

    in_specs = [pl.BlockSpec((bm, a.shape[1]), lambda i: (i, 0)) for a in inputs]
    # Weights / biases: constant index_map -> fetched once and kept resident.
    # Single-buffer them so the parameter stack costs 1x (not 2x) VMEM.
    in_specs += [
        pl.BlockSpec(p.shape, lambda i: (0, 0), pipeline_mode=pl.Buffered(1))
        for p in flat_params
    ]
    out_specs = pl.BlockSpec((bm, out_pad), lambda i: (i, 0))

    kernel = _make_fused_mlp_kernel(len(inputs), n_layers, compute_dtype)
    out = pl.pallas_call(
        kernel,
        out_shape=jax.ShapeDtypeStruct((B_pad, out_pad), inputs[0].dtype),
        grid_spec=pltpu.PrefetchScalarGridSpec(
            num_scalar_prefetch=0,
            grid=(grid_m,),
            in_specs=in_specs,
            out_specs=out_specs,
        ),
        compiler_params=pltpu.CompilerParams(
            # Batch axis is independent -> lets v7x shard it across its 2 TCs.
            dimension_semantics=("parallel",),
            vmem_limit_bytes=_vmem_limit_bytes(inputs, flat_params, bm, out_pad),
        ),
    )(*inputs, *flat_params)
    return out, B_pad


# ----------------------------------------------------------------------------
# MLP module (parameter construction in plain JAX; hot path = ONE Pallas call)
# ----------------------------------------------------------------------------
class MLP:
    def __init__(self, embed_x, embed_y, dim_x, dim_y, hidden_dim, out_dim,
                 n_layers, key, param_dtype=jnp.float32):
        in_dim = embed_x * dim_x + embed_y * dim_y
        assert in_dim != 0
        self.embed_x = embed_x
        self.embed_y = embed_y
        self.out_dim = out_dim
        self.n_layers = n_layers
        self.nx = embed_x * dim_x            # features contributed by flattened x
        self.param_dtype = param_dtype       # f32 (reference-exact) or bf16 (fast)

        if n_layers == 1:
            dims = [(in_dim, out_dim)]
        else:
            dims = [(in_dim, hidden_dim)]
            dims += [(hidden_dim, hidden_dim)] * (n_layers - 2)
            dims.append((hidden_dim, out_dim))

        # Deterministic init mirroring nn.Linear's U(-1/sqrt(fan_in), +1/sqrt(fan_in)).
        raw = []
        for (din, dout) in dims:
            key, kw, kb = jax.random.split(key, 3)
            bound = 1.0 / float(din) ** 0.5
            w = jax.random.uniform(kw, (din, dout), jnp.float32, -bound, bound)
            b = jax.random.uniform(kb, (dout,), jnp.float32, -bound, bound)
            raw.append((w, b))
        self.raw_params = raw  # unpadded f32, for the pure-JAX reference

        # --- Build fusion-ready params: lane dims padded to multiples of 128.
        # Padding is all-zero, so padded lanes carry exact zeros through every
        # layer (0-weight rows/cols, 0 bias) and the final slice is exact.
        self.out_pad = _round_up(out_dim)
        flat = []

        w0, b0 = raw[0]
        o0_pad = _round_up(dims[0][1])
        if self.embed_x and self.embed_y:
            # Split the first weight along the concat axis -> no host concat.
            flat.append(_pad_to(w0[: self.nx], (w0[: self.nx].shape[0], o0_pad)))
            flat.append(_pad_to(w0[self.nx:], (w0[self.nx:].shape[0], o0_pad)))
        else:
            flat.append(_pad_to(w0, (w0.shape[0], o0_pad)))
        flat.append(_pad_to(b0.reshape(1, -1), (1, o0_pad)))  # bias stored (1, out_pad)

        prev_pad = o0_pad
        for (w, b) in raw[1:]:
            o_pad = _round_up(w.shape[1])
            flat.append(_pad_to(w, (prev_pad, o_pad)))
            flat.append(_pad_to(b.reshape(1, -1), (1, o_pad)))
            prev_pad = o_pad

        self.flat_params = [p.astype(param_dtype) for p in flat]
        self.n_inputs = 2 if (self.embed_x and self.embed_y) else 1

    def __call__(self, B):
        x, y = B
        if self.embed_x:
            xf = x.reshape(x.shape[0], -1)            # torch.flatten(x, 1, -1)
            inputs = (xf, y) if self.embed_y else (xf,)
        else:
            inputs = (y,)
        Bsz = inputs[0].shape[0]
        out_padded, B_pad = fused_mlp_pallas(
            inputs, self.flat_params, self.out_pad, self.n_layers,
            compute_dtype=self.param_dtype)
        out = out_padded
        if B_pad != Bsz:
            out = out[:Bsz]
        if self.out_pad != self.out_dim:
            out = out[:, : self.out_dim]
        return out


# ----------------------------------------------------------------------------
# Pure-JAX reference for a sanity check (uses the unpadded f32 params)
# ----------------------------------------------------------------------------
def mlp_ref(model, B):
    x, y = B
    if model.embed_x:
        inp = x.reshape(x.shape[0], -1)
        if model.embed_y:
            inp = jnp.concatenate((inp, y), axis=1)
    else:
        inp = y
    out = inp
    n = len(model.raw_params)
    for i, (w, b) in enumerate(model.raw_params):
        out = out @ w + b
        if i != n - 1:
            out = jnp.maximum(out, 0.0)
    return out


if __name__ == "__main__":
    key = jax.random.PRNGKey(0)
    k_params, kx, ky = jax.random.split(key, 3)

    # Small shapes consistent with the forward pass:
    batch = 2
    embed_x, embed_y = 1, 1
    dim_x, dim_y = 16, 8          # x flattens to 16 features, y has 8 features
    hidden_dim, out_dim = 32, 8
    n_layers = 3

    # x as (batch, 4, 4) -> flattened to (batch, 16); y as (batch, 8)
    x = jax.random.normal(kx, (batch, 4, 4), jnp.float32)
    y = jax.random.normal(ky, (batch, dim_y), jnp.float32)

    # f32 parameters: matches nn.Linear f32 semantics.
    model = MLP(embed_x, embed_y, dim_x, dim_y, hidden_dim, out_dim,
                n_layers, k_params)
    out = jax.block_until_ready(model((x, y)))
    ref = mlp_ref(model, (x, y))
    assert out.shape == (batch, out_dim), out.shape
    assert jnp.allclose(out, ref, atol=1e-4, rtol=1e-4), "mismatch vs reference (f32)"

    # bf16 parameters: native-MXU fast path (same kernel, looser tolerance).
    model_bf16 = MLP(embed_x, embed_y, dim_x, dim_y, hidden_dim, out_dim,
                     n_layers, k_params, param_dtype=jnp.bfloat16)
    out_bf16 = jax.block_until_ready(model_bf16((x, y)))
    assert out_bf16.shape == (batch, out_dim), out_bf16.shape
    assert jnp.allclose(out_bf16.astype(jnp.float32), ref, atol=1e-1, rtol=1e-1), \
        "mismatch vs reference (bf16)"

    print("KERNEL_OK")
</pallas_src>

<mosaic_0001>
module attributes {stable_mosaic.version = 11 : i64} {
  func.func @kernel(%arg0: i32, %arg1: memref<16x16xf32, #tpu.memory_space<vmem>>, %arg2: memref<16x8xf32, #tpu.memory_space<vmem>>, %arg3: memref<16x128xf32, #tpu.memory_space<vmem>>, %arg4: memref<8x128xf32, #tpu.memory_space<vmem>>, %arg5: memref<1x128xf32, #tpu.memory_space<vmem>>, %arg6: memref<128x128xf32, #tpu.memory_space<vmem>>, %arg7: memref<1x128xf32, #tpu.memory_space<vmem>>, %arg8: memref<128x128xf32, #tpu.memory_space<vmem>>, %arg9: memref<1x128xf32, #tpu.memory_space<vmem>>, %arg10: memref<16x128xf32, #tpu.memory_space<vmem>>) attributes {dimension_semantics = [#tpu.dimension_semantics<parallel>], iteration_bounds = array<i64: 1>, scalar_prefetch = 0 : i64, scratch_operands = 0 : i64, tpu.core_type = #tpu.core_type<tc>, window_params = [{transform_indices = @transform_0, window_bounds = array<i64: 16, 16>}, {transform_indices = @transform_1, window_bounds = array<i64: 16, 8>}, {pipeline_mode = #tpu.pipeline_mode<synchronous>, transform_indices = @transform_2, window_bounds = array<i64: 16, 128>}, {pipeline_mode = #tpu.pipeline_mode<synchronous>, transform_indices = @transform_3, window_bounds = array<i64: 8, 128>}, {pipeline_mode = #tpu.pipeline_mode<synchronous>, transform_indices = @transform_4, window_bounds = array<i64: 1, 128>}, {pipeline_mode = #tpu.pipeline_mode<synchronous>, transform_indices = @transform_5, window_bounds = array<i64: 128, 128>}, {pipeline_mode = #tpu.pipeline_mode<synchronous>, transform_indices = @transform_6, window_bounds = array<i64: 1, 128>}, {pipeline_mode = #tpu.pipeline_mode<synchronous>, transform_indices = @transform_7, window_bounds = array<i64: 128, 128>}, {pipeline_mode = #tpu.pipeline_mode<synchronous>, transform_indices = @transform_8, window_bounds = array<i64: 1, 128>}, {transform_indices = @transform_9, window_bounds = array<i64: 16, 128>}]} {
    %c0 = arith.constant 0 : index
    %c0_0 = arith.constant 0 : index
    %0 = vector.load %arg1[%c0, %c0_0] : memref<16x16xf32, #tpu.memory_space<vmem>>, vector<16x16xf32>
    %c0_1 = arith.constant 0 : index
    %c0_2 = arith.constant 0 : index
    %1 = vector.load %arg3[%c0_1, %c0_2] : memref<16x128xf32, #tpu.memory_space<vmem>>, vector<16x128xf32>
    %cst = arith.constant dense<0.000000e+00> : vector<16x128xf32>
    %2 = tpu.matmul %0, %1, %cst {dimension_numbers = #tpu.dot_dimension_numbers<[1], [0], [0], [1], [0, 0, 1, 1], [], []>} : vector<16x16xf32>, vector<16x128xf32>, vector<16x128xf32> -> vector<16x128xf32>
    %c0_3 = arith.constant 0 : index
    %c0_4 = arith.constant 0 : index
    %3 = vector.load %arg2[%c0_3, %c0_4] : memref<16x8xf32, #tpu.memory_space<vmem>>, vector<16x8xf32>
    %c0_5 = arith.constant 0 : index
    %c0_6 = arith.constant 0 : index
    %4 = vector.load %arg4[%c0_5, %c0_6] : memref<8x128xf32, #tpu.memory_space<vmem>>, vector<8x128xf32>
    %cst_7 = arith.constant dense<0.000000e+00> : vector<16x128xf32>
    %5 = tpu.matmul %3, %4, %cst_7 {dimension_numbers = #tpu.dot_dimension_numbers<[1], [0], [0], [1], [0, 0, 1, 1], [], []>} : vector<16x8xf32>, vector<8x128xf32>, vector<16x128xf32> -> vector<16x128xf32>
    %6 = arith.addf %2, %5 : vector<16x128xf32>
    %c0_8 = arith.constant 0 : index
    %c0_9 = arith.constant 0 : index
    %7 = vector.load %arg5[%c0_8, %c0_9] : memref<1x128xf32, #tpu.memory_space<vmem>>, vector<1x128xf32>
    %8 = vector.broadcast %7 : vector<1x128xf32> to vector<16x128xf32>
    %9 = arith.addf %6, %8 : vector<16x128xf32>
    %cst_10 = arith.constant 0.000000e+00 : f32
    %10 = vector.broadcast %cst_10 : f32 to vector<16x128xf32>
    %11 = arith.maximumf %9, %10 : vector<16x128xf32>
    %c0_11 = arith.constant 0 : index
    %c0_12 = arith.constant 0 : index
    %12 = vector.load %arg6[%c0_11, %c0_12] : memref<128x128xf32, #tpu.memory_space<vmem>>, vector<128x128xf32>
    %cst_13 = arith.constant dense<0.000000e+00> : vector<16x128xf32>
    %13 = tpu.matmul %11, %12, %cst_13 {dimension_numbers = #tpu.dot_dimension_numbers<[1], [0], [0], [1], [0, 0, 1, 1], [], []>} : vector<16x128xf32>, vector<128x128xf32>, vector<16x128xf32> -> vector<16x128xf32>
    %c0_14 = arith.constant 0 : index
    %c0_15 = arith.constant 0 : index
    %14 = vector.load %arg7[%c0_14, %c0_15] : memref<1x128xf32, #tpu.memory_space<vmem>>, vector<1x128xf32>
    %15 = vector.broadcast %14 : vector<1x128xf32> to vector<16x128xf32>
    %16 = arith.addf %13, %15 : vector<16x128xf32>
    %cst_16 = arith.constant 0.000000e+00 : f32
    %17 = vector.broadcast %cst_16 : f32 to vector<16x128xf32>
    %18 = arith.maximumf %16, %17 : vector<16x128xf32>
    %c0_17 = arith.constant 0 : index
    %c0_18 = arith.constant 0 : index
    %19 = vector.load %arg8[%c0_17, %c0_18] : memref<128x128xf32, #tpu.memory_space<vmem>>, vector<128x128xf32>
    %cst_19 = arith.constant dense<0.000000e+00> : vector<16x128xf32>
    %20 = tpu.matmul %18, %19, %cst_19 {dimension_numbers = #tpu.dot_dimension_numbers<[1], [0], [0], [1], [0, 0, 1, 1], [], []>} : vector<16x128xf32>, vector<128x128xf32>, vector<16x128xf32> -> vector<16x128xf32>
    %c0_20 = arith.constant 0 : index
    %c0_21 = arith.constant 0 : index
    %21 = vector.load %arg9[%c0_20, %c0_21] : memref<1x128xf32, #tpu.memory_space<vmem>>, vector<1x128xf32>
    %22 = vector.broadcast %21 : vector<1x128xf32> to vector<16x128xf32>
    %23 = arith.addf %20, %22 : vector<16x128xf32>
    %c0_22 = arith.constant 0 : index
    %c0_23 = arith.constant 0 : index
    %24 = vector.load %arg10[%c0_22, %c0_23] : memref<16x128xf32, #tpu.memory_space<vmem>>, vector<16x128xf32>
    tpu.vector_store %arg10[%c0_22, %c0_23], %23 {strides = array<i32>} : memref<16x128xf32, #tpu.memory_space<vmem>>, vector<16x128xf32>,
    return
  }
  func.func @transform_0(%arg0: i32) -> (i32, i32) {
    %c0_i32 = arith.constant 0 : i32
    %c0_i32_0 = arith.constant 0 : i32
    return %arg0, %c0_i32 : i32, i32
  }
  func.func @transform_1(%arg0: i32) -> (i32, i32) {
    %c0_i32 = arith.constant 0 : i32
    %c0_i32_0 = arith.constant 0 : i32
    return %arg0, %c0_i32 : i32, i32
  }
  func.func @transform_2(%arg0: i32) -> (i32, i32) {
    %c0_i32 = arith.constant 0 : i32
    %c0_i32_0 = arith.constant 0 : i32
    %c0_i32_1 = arith.constant 0 : i32
    return %c0_i32, %c0_i32_0 : i32, i32
  }
  func.func @transform_3(%arg0: i32) -> (i32, i32) {
    %c0_i32 = arith.constant 0 : i32
    %c0_i32_0 = arith.constant 0 : i32
    %c0_i32_1 = arith.constant 0 : i32
    return %c0_i32, %c0_i32_0 : i32, i32
  }
  func.func @transform_4(%arg0: i32) -> (i32, i32) {
    %c0_i32 = arith.constant 0 : i32
    %c0_i32_0 = arith.constant 0 : i32
    %c0_i32_1 = arith.constant 0 : i32
    return %c0_i32, %c0_i32_0 : i32, i32
  }
  func.func @transform_5(%arg0: i32) -> (i32, i32) {
    %c0_i32 = arith.constant 0 : i32
    %c0_i32_0 = arith.constant 0 : i32
    %c0_i32_1 = arith.constant 0 : i32
    return %c0_i32, %c0_i32_0 : i32, i32
  }
  func.func @transform_6(%arg0: i32) -> (i32, i32) {
    %c0_i32 = arith.constant 0 : i32
    %c0_i32_0 = arith.constant 0 : i32
    %c0_i32_1 = arith.constant 0 : i32
    return %c0_i32, %c0_i32_0 : i32, i32
  }
  func.func @transform_7(%arg0: i32) -> (i32, i32) {
    %c0_i32 = arith.constant 0 : i32
    %c0_i32_0 = arith.constant 0 : i32
    %c0_i32_1 = arith.constant 0 : i32
    return %c0_i32, %c0_i32_0 : i32, i32
  }
  func.func @transform_8(%arg0: i32) -> (i32, i32) {
    %c0_i32 = arith.constant 0 : i32
    %c0_i32_0 = arith.constant 0 : i32
    %c0_i32_1 = arith.constant 0 : i32
    return %c0_i32, %c0_i32_0 : i32, i32
  }
  func.func @transform_9(%arg0: i32) -> (i32, i32) {
    %c0_i32 = arith.constant 0 : i32
    %c0_i32_0 = arith.constant 0 : i32
    return %arg0, %c0_i32 : i32, i32
  }
}

</mosaic_0001>

<llo_original>
// kernel: tpu_custom_call.1
$region0: #{tpu_custom_call.1}
  #allocation0 [shape = 'u32[]', space=smem, size = 0x4, offset = 0x4, fixed_abs, tag = 'smem constant byte address 0x4 - core index']
  #allocation1 [shape = 'u32[72,128]{1,0:T(1,128)}', space=vmem, size = 0x9000, scoped, tag = 'internal scratch']
  %s0 = inlined_call_operand.vmem [shape: f32[16,16], index: 0, kind: input, shape index: {}]
  %s1 = inlined_call_operand.vmem [shape: f32[16,8], index: 1, kind: input, shape index: {}]
  %s2 = inlined_call_operand.hbm [shape: f32[16,128], index: 2, kind: input, shape index: {}]
  %s3 = inlined_call_operand.vmem [shape: f32[8,128], index: 3, kind: input, shape index: {}]
  %s4 = inlined_call_operand.vmem [shape: f32[1,128], index: 4, kind: input, shape index: {}]
  %s5 = inlined_call_operand.hbm [shape: f32[128,128], index: 5, kind: input, shape index: {}]
  %s6 = inlined_call_operand.vmem [shape: f32[1,128], index: 6, kind: input, shape index: {}]
  %s7 = inlined_call_operand.hbm [shape: f32[128,128], index: 7, kind: input, shape index: {}]
  %s8 = inlined_call_operand.vmem [shape: f32[1,128], index: 8, kind: input, shape index: {}]
  %s9 = inlined_call_operand.hbm [shape: f32[16,128], index: 9, kind: output, shape index: {}]
  %s10 = sld [smem:[#allocation0]]
  $region58: #{tpu_custom_call.1} parent=0
    _
  %s12 = ssub.s32 1, %s10
  %s13 = scalar_select 0, %s12, %s10
  $region1: #{tpu_custom_call.1} parent=0
    #allocation2 [shape = 'u8[8192]{0}', space=vmem, size = 0x2000, scoped, tag = 'input window, operand 2, single buffered']
    #allocation3 [shape = 's32[1]{0}', space=sflag, size = 0x4, scoped, tag = 'scoped memory for tpu_custom_call.1']
    #allocation4 [shape = 's32[1]{0}', space=sflag, size = 0x4, scoped, tag = 'scoped memory for tpu_custom_call.1']
    #allocation5 [shape = 'u8[65536]{0}', space=vmem, size = 0x10000, scoped, tag = 'input window, operand 5, single buffered']
    #allocation6 [shape = 's32[1]{0}', space=sflag, size = 0x4, scoped, tag = 'scoped memory for tpu_custom_call.1']
    #allocation7 [shape = 'u8[65536]{0}', space=vmem, size = 0x10000, scoped, tag = 'input window, operand 7, single buffered']
    #allocation8 [shape = 'u8[8192]{0}', space=vmem, size = 0x2000, scoped, tag = 'output window, operand 0, single buffered']
    %14 = vsyncpa [#allocation3], 0
    %15 = vsyncpa [#allocation6], 0
    %16 = vsyncpa [#allocation4], 0
    // Predicated region
    $region2: #{tpu_custom_call.1} parent=1 // pred_check
      _
    $region3: #{tpu_custom_call.1} parent=1 // pred_check_branch
      %18 = sbr.rel (0) target = $region5
    $region4: #{tpu_custom_call.1} parent=1 // pred_region
      _
    $region5: #{tpu_custom_call.1} parent=1 // pred_fallthru
      _
    // Predicated region
    $region6: #{tpu_custom_call.1} parent=1 // pred_check
      _
    $region7: #{tpu_custom_call.1} parent=1 // pred_check_branch
      %20 = sbr.rel (0) target = $region9
    $region8: #{tpu_custom_call.1} parent=1 // pred_region
      _
    $region9: #{tpu_custom_call.1} parent=1 // pred_fallthru
      _
    // Predicated region
    $region10: #{tpu_custom_call.1} parent=1 // pred_check
      _
    $region11: #{tpu_custom_call.1} parent=1 // pred_check_branch
      %22 = sbr.rel (0) target = $region13
    $region12: #{tpu_custom_call.1} parent=1 // pred_region
      %24 = vsyncadd [#allocation3], 0
      %s25 = sshll.u32 %s2, 4
      %s26 = int_to_ptr.hbm [resolvable:$true] %s25
      %s27 = sshll.u32 [#allocation2], 4
      %s28 = int_to_ptr.vmem [resolvable:$true] %s27
      %33 = dma.hbm_to_vmem [thread:$0]  %s26, 256, %s28, [#allocation3], 128, 128, 8
    $region13: #{tpu_custom_call.1} parent=1 // pred_fallthru
      _
    // Predicated region
    $region14: #{tpu_custom_call.1} parent=1 // pred_check
      _
    $region15: #{tpu_custom_call.1} parent=1 // pred_check_branch
      %35 = sbr.rel (0) target = $region17
    $region16: #{tpu_custom_call.1} parent=1 // pred_region
      _
    $region17: #{tpu_custom_call.1} parent=1 // pred_fallthru
      _
    // Predicated region
    $region18: #{tpu_custom_call.1} parent=1 // pred_check
      _
    $region19: #{tpu_custom_call.1} parent=1 // pred_check_branch
      %37 = sbr.rel (0) target = $region21
    $region20: #{tpu_custom_call.1} parent=1 // pred_region
      _
    $region21: #{tpu_custom_call.1} parent=1 // pred_fallthru
      _
    // Predicated region
    $region22: #{tpu_custom_call.1} parent=1 // pred_check
      _
    $region23: #{tpu_custom_call.1} parent=1 // pred_check_branch
      %39 = sbr.rel (0) target = $region25
    $region24: #{tpu_custom_call.1} parent=1 // pred_region
      %41 = vsyncadd [#allocation6], 0
      %s42 = sshll.u32 %s5, 4
      %s43 = int_to_ptr.hbm [resolvable:$true] %s42
      %s44 = sshll.u32 [#allocation5], 4
      %s45 = int_to_ptr.vmem [resolvable:$true] %s44
      %50 = dma.hbm_to_vmem [thread:$0]  %s43, 2048, %s45, [#allocation6], 128, 128, 8
    $region25: #{tpu_custom_call.1} parent=1 // pred_fallthru
      _
    // Predicated region
    $region26: #{tpu_custom_call.1} parent=1 // pred_check
      _
    $region27: #{tpu_custom_call.1} parent=1 // pred_check_branch
      %52 = sbr.rel (0) target = $region29
    $region28: #{tpu_custom_call.1} parent=1 // pred_region
      _
    $region29: #{tpu_custom_call.1} parent=1 // pred_fallthru
      _
    // Predicated region
    $region30: #{tpu_custom_call.1} parent=1 // pred_check
      _
    $region31: #{tpu_custom_call.1} parent=1 // pred_check_branch
      %54 = sbr.rel (0) target = $region33
    $region32: #{tpu_custom_call.1} parent=1 // pred_region
      %56 = vsyncadd [#allocation6], 0
      %s57 = sshll.u32 %s7, 4
      %s58 = int_to_ptr.hbm [resolvable:$true] %s57
      %s59 = sshll.u32 [#allocation7], 4
      %s60 = int_to_ptr.vmem [resolvable:$true] %s59
      %65 = dma.hbm_to_vmem [thread:$0]  %s58, 2048, %s60, [#allocation6], 128, 128, 8
    $region33: #{tpu_custom_call.1} parent=1 // pred_fallthru
      _
    // Predicated region
    $region34: #{tpu_custom_call.1} parent=1 // pred_check
      _
    $region35: #{tpu_custom_call.1} parent=1 // pred_check_branch
      %67 = sbr.rel (0) target = $region37
    $region36: #{tpu_custom_call.1} parent=1 // pred_region
      _
    $region37: #{tpu_custom_call.1} parent=1 // pred_fallthru
      _
    // Predicated region
    $region38: #{tpu_custom_call.1} parent=1 // pred_check
      _
    $region39: #{tpu_custom_call.1} parent=1 // pred_check_branch
      %69 = sbr.rel (0) target = $region41
    $region40: #{tpu_custom_call.1} parent=1 // pred_region
      %71 = dma.done [#allocation3], 256
    $region41: #{tpu_custom_call.1} parent=1 // pred_fallthru
      _
    // Predicated region
    $region42: #{tpu_custom_call.1} parent=1 // pred_check
      _
    $region43: #{tpu_custom_call.1} parent=1 // pred_check_branch
      %73 = sbr.rel (0) target = $region45
    $region44: #{tpu_custom_call.1} parent=1 // pred_region
      %75 = dma.done [#allocation6], 2048
    $region45: #{tpu_custom_call.1} parent=1 // pred_fallthru
      _
    // Predicated region
    $region46: #{tpu_custom_call.1} parent=1 // pred_check
      _
    $region47: #{tpu_custom_call.1} parent=1 // pred_check_branch
      %77 = sbr.rel (0) target = $region49
    $region48: #{tpu_custom_call.1} parent=1 // pred_region
      %79 = dma.done [#allocation6], 2048
    $region49: #{tpu_custom_call.1} parent=1 // pred_fallthru
      _
    %v80 = vld [vmem:[%s0] sm:$0xff]
    %v81 = vld [vmem:[%s0 + $0x8] sm:$0xff]
    %v82 = vld [vmem:[#allocation2] sm:$0xff]
    %v83 = vld [vmem:[#allocation2 + $0x8] sm:$0xff]
    %v84 = vld [vmem:[%s1] sm:$0xff]
    %v85 = vld [vmem:[%s1 + $0x8] sm:$0xff]
    %v86 = vld [vmem:[%s3] sm:$0xff]
    %vm87 = vcmask 64512
    %v89 = vsel %vm87, %v84, 0
    %v92 = vsel %vm87, %v85, 0
    %94 = vmatpush.msra.mxu0 0.0
    %95 = vmatpush.msra.mxu0 0.0
    %96 = vmatpush.msra.mxu0 0.0
    %97 = vmatpush.msra.mxu0 0.0
    %98 = vmatpush.msra.mxu0 0.0
    %99 = vmatpush.msra.mxu0 0.0
    %100 = vmatpush.msra.mxu0 0.0
    %101 = vmatpush.msra.mxu0 0.0
    %102 = vmatpush.msra.mxu0 0.0
    %103 = vmatpush.msra.mxu0 0.0
    %104 = vmatpush.msra.mxu0 0.0
    %105 = vmatpush.msra.mxu0 0.0
    %106 = vmatpush.msra.mxu0 0.0
    %107 = vmatpush.msra.mxu0 0.0
    %108 = vmatpush.msra.mxu0 0.0
    %109 = vmatpush.msra.mxu0 %v86
    %110 = vmatmul.f32.gmra.mxu0 %v89
    %v111 = vpop.f32.mrf.mxu0
    %v112 = vadd.f32 0.0, %v111
    %113 = vmatmul.f32.gmra.mxu0 %v92
    %v114 = vpop.f32.mrf.mxu0
    %v115 = vadd.f32 0.0, %v114
    %116 = vdwg.mxu0
    %vm117 = vcmask 130048
    %v119 = vsel %vm117, %v80, 0
    %v122 = vsel %vm117, %v81, 0
    %124 = vmatpush.msra.mxu0 0.0
    %125 = vmatpush.msra.mxu0 0.0
    %126 = vmatpush.msra.mxu0 0.0
    %127 = vmatpush.msra.mxu0 0.0
    %128 = vmatpush.msra.mxu0 0.0
    %129 = vmatpush.msra.mxu0 0.0
    %130 = vmatpush.msra.mxu0 0.0
    %131 = vmatpush.msra.mxu0 0.0
    %132 = vmatpush.msra.mxu0 0.0
    %133 = vmatpush.msra.mxu0 0.0
    %134 = vmatpush.msra.mxu0 0.0
    %135 = vmatpush.msra.mxu0 0.0
    %136 = vmatpush.msra.mxu0 0.0
    %137 = vmatpush.msra.mxu0 0.0
    %138 = vmatpush.msra.mxu0 %v83
    %139 = vmatpush.msra.mxu0 %v82
    %140 = vmatmul.f32.gmra.mxu0 %v119
    %v141 = vpop.f32.mrf.mxu0
    %v142 = vadd.f32 %v112, %v141
    %143 = vmatmul.f32.gmra.mxu0 %v122
    %v144 = vpop.f32.mrf.mxu0
    %v145 = vadd.f32 %v115, %v144
    %146 = vdwg.mxu0
    %v147 = vld [vmem:[%s4] sm:$0x1]
    %v149 = vperm.slane %v147, 0
    %v151 = vadd.f32 %v142, %v149
    %v152 = vadd.f32 %v145, %v149
    %v153 = vmax.f32 %v151, 0.0
    %v154 = vmax.f32 %v152, 0.0
    %v155 = vld [vmem:[#allocation5] sm:$0xff]
    %v156 = vld [vmem:[#allocation5 + $0x8] sm:$0xff]
    %v157 = vld [vmem:[#allocation5 + $0x10] sm:$0xff]
    %v158 = vld [vmem:[#allocation5 + $0x18] sm:$0xff]
    %v159 = vld [vmem:[#allocation5 + $0x20] sm:$0xff]
    %v160 = vld [vmem:[#allocation5 + $0x28] sm:$0xff]
    %v161 = vld [vmem:[#allocation5 + $0x30] sm:$0xff]
    %v162 = vld [vmem:[#allocation5 + $0x38] sm:$0xff]
    %v163 = vld [vmem:[#allocation5 + $0x40] sm:$0xff]
    %v164 = vld [vmem:[#allocation5 + $0x48] sm:$0xff]
    %v165 = vld [vmem:[#allocation5 + $0x50] sm:$0xff]
    %v166 = vld [vmem:[#allocation5 + $0x58] sm:$0xff]
    %v167 = vld [vmem:[#allocation5 + $0x60] sm:$0xff]
    %v168 = vld [vmem:[#allocation5 + $0x68] sm:$0xff]
    %v169 = vld [vmem:[#allocation5 + $0x70] sm:$0xff]
    %v170 = vld [vmem:[#allocation5 + $0x78] sm:$0xff]
    %v171 = vld [vmem:[%s6] sm:$0x1]
    %v173 = vperm.slane %v171, 0
    %175 = vmatpush.msra.mxu0 %v170
    %176 = vmatpush.msra.mxu0 %v169
    %177 = vmatpush.msra.mxu0 %v168
    %178 = vmatpush.msra.mxu0 %v167
    %179 = vmatpush.msra.mxu0 %v166
    %180 = vmatpush.msra.mxu0 %v165
    %181 = vmatpush.msra.mxu0 %v164
    %182 = vmatpush.msra.mxu0 %v163
    %183 = vmatpush.msra.mxu0 %v162
    %184 = vmatpush.msra.mxu0 %v161
    %185 = vmatpush.msra.mxu0 %v160
    %186 = vmatpush.msra.mxu0 %v159
    %187 = vmatpush.msra.mxu0 %v158
    %188 = vmatpush.msra.mxu0 %v157
    %189 = vmatpush.msra.mxu0 %v156
    %190 = vmatpush.msra.mxu0 %v155
    %191 = vmatmul.f32.gmra.mxu0 %v153
    %v192 = vpop.f32.mrf.mxu0
    %v193 = vadd.f32 %v173, %v192
    %194 = vmatmul.f32.gmra.mxu0 %v154
    %v195 = vpop.f32.mrf.mxu0
    %v196 = vadd.f32 %v173, %v195
    %197 = vdwg.mxu0
    %v198 = vmax.f32 %v193, 0.0
    %v199 = vmax.f32 %v196, 0.0
    %v200 = vld [vmem:[#allocation7] sm:$0xff]
    %v201 = vld [vmem:[#allocation7 + $0x8] sm:$0xff]
    %v202 = vld [vmem:[#allocation7 + $0x10] sm:$0xff]
    %v203 = vld [vmem:[#allocation7 + $0x18] sm:$0xff]
    %v204 = vld [vmem:[#allocation7 + $0x20] sm:$0xff]
    %v205 = vld [vmem:[#allocation7 + $0x28] sm:$0xff]
    %v206 = vld [vmem:[#allocation7 + $0x30] sm:$0xff]
    %v207 = vld [vmem:[#allocation7 + $0x38] sm:$0xff]
    %v208 = vld [vmem:[#allocation7 + $0x40] sm:$0xff]
    %v209 = vld [vmem:[#allocation7 + $0x48] sm:$0xff]
    %v210 = vld [vmem:[#allocation7 + $0x50] sm:$0xff]
    %v211 = vld [vmem:[#allocation7 + $0x58] sm:$0xff]
    %v212 = vld [vmem:[#allocation7 + $0x60] sm:$0xff]
    %v213 = vld [vmem:[#allocation7 + $0x68] sm:$0xff]
    %v214 = vld [vmem:[#allocation7 + $0x70] sm:$0xff]
    %v215 = vld [vmem:[#allocation7 + $0x78] sm:$0xff]
    %v216 = vld [vmem:[%s8] sm:$0x1]
    %v218 = vperm.slane %v216, 0
    %220 = vmatpush.msra.mxu0 %v215
    %221 = vmatpush.msra.mxu0 %v214
    %222 = vmatpush.msra.mxu0 %v213
    %223 = vmatpush.msra.mxu0 %v212
    %224 = vmatpush.msra.mxu0 %v211
    %225 = vmatpush.msra.mxu0 %v210
    %226 = vmatpush.msra.mxu0 %v209
    %227 = vmatpush.msra.mxu0 %v208
    %228 = vmatpush.msra.mxu0 %v207
    %229 = vmatpush.msra.mxu0 %v206
    %230 = vmatpush.msra.mxu0 %v205
    %231 = vmatpush.msra.mxu0 %v204
    %232 = vmatpush.msra.mxu0 %v203
    %233 = vmatpush.msra.mxu0 %v202
    %234 = vmatpush.msra.mxu0 %v201
    %235 = vmatpush.msra.mxu0 %v200
    %236 = vmatmul.f32.gmra.mxu0 %v198
    %v237 = vpop.f32.mrf.mxu0
    %v238 = vadd.f32 %v218, %v237
    %239 = vmatmul.f32.gmra.mxu0 %v199
    %v240 = vpop.f32.mrf.mxu0
    %v241 = vadd.f32 %v218, %v240
    %242 = vdwg.mxu0
    %243 = vst [vmem:[#allocation8] sm:$0xff] %v238
    %244 = vst [vmem:[#allocation8 + $0x8] sm:$0xff] %v241
    // Predicated region
    $region50: #{tpu_custom_call.1} parent=1 // pred_check
      _
    $region51: #{tpu_custom_call.1} parent=1 // pred_check_branch
      %246 = sbr.rel (0) target = $region53
    $region52: #{tpu_custom_call.1} parent=1 // pred_region
      %248 = vsyncadd [#allocation4], 0
      %s249 = sshll.u32 [#allocation8], 4
      %s250 = int_to_ptr.vmem [resolvable:$true] %s249
      %s251 = sshll.u32 %s9, 4
      %s252 = int_to_ptr.hbm [resolvable:$true] %s251
      %257 = dma.vmem_to_hbm [thread:$0]  %s250, 256, %s252, [#allocation4], 128, 128, 8
    $region53: #{tpu_custom_call.1} parent=1 // pred_fallthru
      _
    // Predicated region
    $region54: #{tpu_custom_call.1} parent=1 // pred_check
      _
    $region55: #{tpu_custom_call.1} parent=1 // pred_check_branch
      %259 = sbr.rel (0) target = $region57
    $region56: #{tpu_custom_call.1} parent=1 // pred_region
      %261 = dma.done [#allocation4], 256
    $region57: #{tpu_custom_call.1} parent=1 // pred_fallthru
      _
    %262 = vsyncpa [#allocation3], 1
    %263 = vsyncpa [#allocation6], 1
    %264 = vsyncpa [#allocation4], 1

</llo_original>
